<compile_context>
chip_gen: v5e
topology: v5e:2x2
jax: 0.10.0
libtpu: 0.0.40
codegen_flags: <defaults>
</compile_context>

<pallas_src>
import functools

import jax
import jax.numpy as jnp
from jax.experimental import pallas as pl
from jax.experimental.pallas import tpu as pltpu


def _round_up(x, m):
    return ((x + m - 1) // m) * m


def _gating_kernel(x_ref, w_ref, b_ref, weights_ref, topk_ref, *, k):
    # x_ref:       (tm, D)    token tile (f32 or bf16)
    # w_ref:       (D, E)     gate weight, pre-transposed (resident, single-buffered)
    # b_ref:       (1, E)     gate bias (resident, single-buffered)
    # weights_ref: (tm, E)    full softmax weights (f32)
    # topk_ref:    (tm, 2k)   packed [topk values (k) | topk indices as f32 (k)]
    x = x_ref[...]
    w = w_ref[...]
    b = b_ref[...].astype(jnp.float32)

    # Linear: x @ W^T + b.  W was pre-transposed in the wrapper -> plain x @ w.
    # MXU matmul with f32 accumulation; works with f32 or bf16 operands.
    logits = jnp.dot(x, w, preferred_element_type=jnp.float32) + b

    # Numerically stable softmax over experts (last axis), f32 throughout.
    # The kernel is HBM-bound, so the reciprocal is exact (approx buys nothing).
    m = jnp.max(logits, axis=-1, keepdims=True)
    e = jnp.exp(logits - m)
    denom = jnp.sum(e, axis=-1, keepdims=True)
    inv = pl.reciprocal(denom)                       # exact (approx=False default)
    weights_ref[...] = (e * inv).astype(weights_ref.dtype)

    # Top-k via iterative argmax on the un-normalized exp values (same ordering
    # as the softmax weights).  k is small, statically unrolled.
    E = e.shape[-1]
    col = jax.lax.broadcasted_iota(jnp.int32, e.shape, dimension=1)
    work = e
    vals = []
    idxs = []
    for j in range(k):
        if j == 0:
            # First pick: argmax taken directly from the logits (reuses the
            # softmax max `m`, skipping one cross-lane reduction) rather than
            # relying on the hardware exp returning exactly 1.0 at input 0.
            idx = jnp.min(jnp.where(logits == m, col, E), axis=-1, keepdims=True)
            mx = jnp.ones_like(m)                    # e at idx == exp(0.0) == 1.0
        else:
            mx = jnp.max(work, axis=-1, keepdims=True)
            # First (lowest-index) maximum, matching lax.top_k / torch.topk ties.
            idx = jnp.min(jnp.where(work == mx, col, E), axis=-1, keepdims=True)
        vals.append(mx * inv)                        # softmax value of the pick
        idxs.append(idx.astype(jnp.float32))         # small ints: exact in f32
        # Mask out the selected expert (e > 0, so -1.0 is a safe sentinel).
        work = jnp.where(col == idx, jnp.float32(-1.0), work)

    # One lane-contiguous store instead of two tiny masked stores.
    topk_ref[...] = jnp.concatenate(vals + idxs, axis=-1).astype(topk_ref.dtype)


def _vmem_capacity_bytes():
    """Per-core VMEM capacity; conservative fallback if the query is unavailable."""
    try:
        return int(pltpu.get_tpu_info().vmem_capacity_bytes)
    except Exception:
        return 64 * 2**20        # v7x per-core VMEM — safe lower bound everywhere


def _vmem_estimate_bytes(tm, D, E, k, x_bytes, w_bytes):
    # x tile double-buffered; gate weight + bias single-buffered (Buffered(1),
    # constant index_map); both outputs are f32 and double-buffered.
    return (2 * tm * D * x_bytes
            + (D * E + E) * w_bytes
            + 4 * (2 * tm * E + 2 * tm * 2 * k))


def gating_network(x, gate_w, gate_b, *, k=2, tm=512, compute_dtype=None):
    """x: (T, d_model); gate_w: (E, d_model); gate_b: (E,).

    Returns (topk_weights (T,k) f32, topk_indices (T,k) int32, weights (T,E) f32).

    compute_dtype: optional dtype (e.g. jnp.bfloat16) for the matmul operands.
    The kernel is HBM-bound on the x stream, so bf16 activations are the single
    biggest lever (~2x) on v5e/v6e/v7x; softmax math stays f32 regardless.
    """
    T, D = x.shape
    E = gate_w.shape[0]
    assert E < (1 << 24), "top-k indices round-trip through f32 (exact only for E < 2^24)"

    # Pre-transpose the gate weight once (D, E); bias as a (1, E) row.
    wt = jnp.transpose(gate_w)                       # (D, E)
    if compute_dtype is not None:
        x = x.astype(compute_dtype)
        wt = wt.astype(compute_dtype)
    b2 = gate_b.reshape(1, E)

    # Generation-aware VMEM budget (v5e/v6e: 128 MiB, v7x: 64 MiB per core).
    cap = _vmem_capacity_bytes()
    tile_budget = (cap * 3) // 4
    vmem_limit = int(min(cap - (8 << 20), tile_budget + (16 << 20)))

    x_bytes = jnp.dtype(x.dtype).itemsize
    w_bytes = jnp.dtype(wt.dtype).itemsize

    # Token tile: multiple of 8, no bigger than the padded token count, and
    # clamped so the working set fits the VMEM budget.
    T_pad8 = _round_up(T, 8)
    tm = min(tm, T_pad8)
    while tm > 8 and _vmem_estimate_bytes(tm, D, E, k, x_bytes, w_bytes) > tile_budget:
        tm = max(8, (tm // 2) // 8 * 8)

    # Megacore (v7x): make sure the token axis has >= 2 blocks so the "parallel"
    # grid dimension can be sharded across both TensorCores.
    if T_pad8 >= 16 and T_pad8 // tm < 2:
        tm = min(tm, _round_up((T_pad8 + 1) // 2, 8))

    T_pad = _round_up(T, tm)
    if T_pad != T:
        x = jnp.pad(x, ((0, T_pad - T), (0, 0)))

    kernel = functools.partial(_gating_kernel, k=k)

    weights, packed = pl.pallas_call(
        kernel,
        out_shape=(
            jax.ShapeDtypeStruct((T_pad, E), jnp.float32),
            jax.ShapeDtypeStruct((T_pad, 2 * k), jnp.float32),
        ),
        grid_spec=pltpu.PrefetchScalarGridSpec(
            num_scalar_prefetch=0,
            grid=(T_pad // tm,),
            in_specs=[
                pl.BlockSpec((tm, D), lambda i: (i, 0)),   # token tile (double-buffered)
                # Gate weight / bias never change across grid steps: single-buffer
                # them so the redundant second copy doesn't eat the token-tile budget.
                pl.BlockSpec((D, E), lambda i: (0, 0), pipeline_mode=pl.Buffered(1)),
                pl.BlockSpec((1, E), lambda i: (0, 0), pipeline_mode=pl.Buffered(1)),
            ],
            out_specs=[
                pl.BlockSpec((tm, E), lambda i: (i, 0)),        # softmax weights
                pl.BlockSpec((tm, 2 * k), lambda i: (i, 0)),    # packed top-k
            ],
        ),
        compiler_params=pltpu.CompilerParams(
            dimension_semantics=("parallel",),      # shards token axis on v7x 2xTC
            vmem_limit_bytes=vmem_limit,
        ),
    )(x, wt, b2)

    weights = weights[:T]
    packed = packed[:T]
    topk_w = packed[:, :k]
    topk_i = packed[:, k:].astype(jnp.int32)        # exact: small integer floats
    return topk_w, topk_i, weights


if __name__ == "__main__":
    # Small shapes consistent with the module: batch=2, seq=8, d_model=32, experts=8, k=2.
    batch, seq, d_model, num_experts, k = 2, 8, 32, 8, 2

    key = jax.random.PRNGKey(0)
    kx, kw, kb = jax.random.split(key, 3)
    # Quantize inputs to bf16-representable values so the kernel/reference
    # comparison is independent of the backend's default f32-matmul precision
    # (and so the bf16 compute path is numerically comparable too).
    x = jax.random.normal(kx, (batch, seq, d_model), dtype=jnp.float32)
    x = x.astype(jnp.bfloat16).astype(jnp.float32)
    bound = 1.0 / (d_model ** 0.5)
    gate_w = jax.random.uniform(kw, (num_experts, d_model), jnp.float32, -bound, bound)
    gate_w = gate_w.astype(jnp.bfloat16).astype(jnp.float32)
    gate_b = jax.random.uniform(kb, (num_experts,), jnp.float32, -bound, bound)
    gate_b = gate_b.astype(jnp.bfloat16).astype(jnp.float32)

    # layout: flatten (batch, seq, d_model) -> (T, d_model) token-major
    x_tok = x.reshape(batch * seq, d_model)

    # Pure-JAX reference.
    logits_ref = x_tok @ gate_w.T + gate_b
    weights_ref = jax.nn.softmax(logits_ref, axis=-1)
    tw_ref, ti_ref = jax.lax.top_k(weights_ref, k)

    # f32 path (exact softmax divide -> tight tolerance).
    topk_w, topk_i, weights = gating_network(x_tok, gate_w, gate_b, k=k)
    jax.block_until_ready((topk_w, topk_i, weights))
    assert jnp.allclose(weights, weights_ref, atol=1e-4, rtol=1e-4)
    assert jnp.allclose(topk_w, tw_ref, atol=1e-4, rtol=1e-4)
    assert jnp.array_equal(topk_i, ti_ref.astype(jnp.int32))

    # bf16 activation path (the big HBM-bandwidth lever on real shapes).
    tw_bf, ti_bf, w_bf = gating_network(x_tok, gate_w, gate_b, k=k,
                                        compute_dtype=jnp.bfloat16)
    jax.block_until_ready((tw_bf, ti_bf, w_bf))
    assert jnp.allclose(w_bf, weights_ref, atol=1e-3, rtol=1e-3)
    # Internal consistency: reported top-k values match the full weights output.
    assert jnp.allclose(tw_bf, jnp.take_along_axis(w_bf, ti_bf, axis=-1), atol=1e-6)

    # Reshape back to (batch, seq, ...) like the PyTorch module would return.
    topk_w = topk_w.reshape(batch, seq, k)
    topk_i = topk_i.reshape(batch, seq, k)
    weights = weights.reshape(batch, seq, num_experts)

    print("KERNEL_OK")
</pallas_src>

<mosaic_0001>
module attributes {stable_mosaic.version = 11 : i64} {
  func.func @_gating_kernel(%arg0: i32, %arg1: memref<8x32xf32, #tpu.memory_space<vmem>>, %arg2: memref<32x8xf32, #tpu.memory_space<vmem>>, %arg3: memref<1x8xf32, #tpu.memory_space<vmem>>, %arg4: memref<8x8xf32, #tpu.memory_space<vmem>>, %arg5: memref<8x4xf32, #tpu.memory_space<vmem>>) attributes {dimension_semantics = [#tpu.dimension_semantics<parallel>], iteration_bounds = array<i64: 2>, scalar_prefetch = 0 : i64, scratch_operands = 0 : i64, tpu.core_type = #tpu.core_type<tc>, window_params = [{transform_indices = @transform_0, window_bounds = array<i64: 8, 32>}, {pipeline_mode = #tpu.pipeline_mode<synchronous>, transform_indices = @transform_1, window_bounds = array<i64: 32, 8>}, {pipeline_mode = #tpu.pipeline_mode<synchronous>, transform_indices = @transform_2, window_bounds = array<i64: 1, 8>}, {transform_indices = @transform_3, window_bounds = array<i64: 8, 8>}, {transform_indices = @transform_4, window_bounds = array<i64: 8, 4>}]} {
    %c0 = arith.constant 0 : index
    %c0_0 = arith.constant 0 : index
    %0 = vector.load %arg1[%c0, %c0_0] : memref<8x32xf32, #tpu.memory_space<vmem>>, vector<8x32xf32>
    %c0_1 = arith.constant 0 : index
    %c0_2 = arith.constant 0 : index
    %1 = vector.load %arg2[%c0_1, %c0_2] : memref<32x8xf32, #tpu.memory_space<vmem>>, vector<32x8xf32>
    %c0_3 = arith.constant 0 : index
    %c0_4 = arith.constant 0 : index
    %2 = vector.load %arg3[%c0_3, %c0_4] : memref<1x8xf32, #tpu.memory_space<vmem>>, vector<1x8xf32>
    %cst = arith.constant dense<0.000000e+00> : vector<8x8xf32>
    %3 = tpu.matmul %0, %1, %cst {dimension_numbers = #tpu.dot_dimension_numbers<[1], [0], [0], [1], [0, 0, 1, 1], [], []>} : vector<8x32xf32>, vector<32x8xf32>, vector<8x8xf32> -> vector<8x8xf32>
    %4 = vector.broadcast %2 : vector<1x8xf32> to vector<8x8xf32>
    %5 = arith.addf %3, %4 : vector<8x8xf32>
    %cst_5 = arith.constant dense<0xFF800000> : vector<8xf32>
    %6 = vector.multi_reduction <maximumf>, %5, %cst_5 [1] : vector<8x8xf32> to vector<8xf32>
    %7 = vector.shape_cast %6 : vector<8xf32> to vector<8x1xf32>
    %8 = vector.broadcast %7 : vector<8x1xf32> to vector<8x8xf32>
    %9 = arith.subf %5, %8 : vector<8x8xf32>
    %10 = math.exp %9 : vector<8x8xf32>
    %cst_6 = arith.constant dense<0.000000e+00> : vector<8xf32>
    %11 = vector.multi_reduction <add>, %10, %cst_6 [1] : vector<8x8xf32> to vector<8xf32>
    %12 = vector.shape_cast %11 : vector<8xf32> to vector<8x1xf32>
    %13 = tpu.reciprocal %12 : vector<8x1xf32> -> vector<8x1xf32>
    %14 = vector.broadcast %13 : vector<8x1xf32> to vector<8x8xf32>
    %15 = arith.mulf %10, %14 : vector<8x8xf32>
    %c0_7 = arith.constant 0 : index
    %c0_8 = arith.constant 0 : index
    %16 = vector.load %arg4[%c0_7, %c0_8] : memref<8x8xf32, #tpu.memory_space<vmem>>, vector<8x8xf32>
    tpu.vector_store %arg4[%c0_7, %c0_8], %15 {strides = array<i32>} : memref<8x8xf32, #tpu.memory_space<vmem>>, vector<8x8xf32>,
    %17 = tpu.iota {dimensions = array<i32: 1>} : vector<8x8xi32>
    %18 = vector.broadcast %7 : vector<8x1xf32> to vector<8x8xf32>
    %19 = arith.cmpf oeq, %5, %18 : vector<8x8xf32>
    %c8_i32 = arith.constant 8 : i32
    %20 = vector.broadcast %c8_i32 : i32 to vector<8x8xi32>
    %21 = arith.select %19, %17, %20 : vector<8x8xi1>, vector<8x8xi32>
    %cst_9 = arith.constant dense<2147483647> : vector<8xi32>
    %22 = vector.multi_reduction <minsi>, %21, %cst_9 [1] : vector<8x8xi32> to vector<8xi32>
    %23 = vector.shape_cast %22 : vector<8xi32> to vector<8x1xi32>
    %cst_10 = arith.constant 1.000000e+00 : f32
    %24 = vector.broadcast %cst_10 : f32 to vector<8x1xf32>
    %25 = arith.mulf %24, %13 : vector<8x1xf32>
    %26 = arith.sitofp %23 : vector<8x1xi32> to vector<8x1xf32>
    %27 = vector.broadcast %23 : vector<8x1xi32> to vector<8x8xi32>
    %28 = arith.cmpi eq, %17, %27 : vector<8x8xi32>
    %cst_11 = arith.constant -1.000000e+00 : f32
    %29 = vector.broadcast %cst_11 : f32 to vector<8x8xf32>
    %30 = arith.select %28, %29, %10 : vector<8x8xi1>, vector<8x8xf32>
    %cst_12 = arith.constant dense<0xFF800000> : vector<8xf32>
    %31 = vector.multi_reduction <maximumf>, %30, %cst_12 [1] : vector<8x8xf32> to vector<8xf32>
    %32 = vector.shape_cast %31 : vector<8xf32> to vector<8x1xf32>
    %33 = vector.broadcast %32 : vector<8x1xf32> to vector<8x8xf32>
    %34 = arith.cmpf oeq, %30, %33 : vector<8x8xf32>
    %c8_i32_13 = arith.constant 8 : i32
    %35 = vector.broadcast %c8_i32_13 : i32 to vector<8x8xi32>
    %36 = arith.select %34, %17, %35 : vector<8x8xi1>, vector<8x8xi32>
    %cst_14 = arith.constant dense<2147483647> : vector<8xi32>
    %37 = vector.multi_reduction <minsi>, %36, %cst_14 [1] : vector<8x8xi32> to vector<8xi32>
    %38 = vector.shape_cast %37 : vector<8xi32> to vector<8x1xi32>
    %39 = arith.mulf %32, %13 : vector<8x1xf32>
    %40 = arith.sitofp %38 : vector<8x1xi32> to vector<8x1xf32>
    %41 = tpu.concatenate %25, %39, %26, %40 in 1 : vector<8x1xf32>, vector<8x1xf32>, vector<8x1xf32>, vector<8x1xf32> -> vector<8x4xf32>
    %c0_15 = arith.constant 0 : index
    %c0_16 = arith.constant 0 : index
    %42 = vector.load %arg5[%c0_15, %c0_16] : memref<8x4xf32, #tpu.memory_space<vmem>>, vector<8x4xf32>
    tpu.vector_store %arg5[%c0_15, %c0_16], %41 {strides = array<i32>} : memref<8x4xf32, #tpu.memory_space<vmem>>, vector<8x4xf32>,
    return
  }
  func.func @transform_0(%arg0: i32) -> (i32, i32) {
    %c0_i32 = arith.constant 0 : i32
    %c0_i32_0 = arith.constant 0 : i32
    return %arg0, %c0_i32 : i32, i32
  }
  func.func @transform_1(%arg0: i32) -> (i32, i32) {
    %c0_i32 = arith.constant 0 : i32
    %c0_i32_0 = arith.constant 0 : i32
    %c0_i32_1 = arith.constant 0 : i32
    return %c0_i32, %c0_i32_0 : i32, i32
  }
  func.func @transform_2(%arg0: i32) -> (i32, i32) {
    %c0_i32 = arith.constant 0 : i32
    %c0_i32_0 = arith.constant 0 : i32
    %c0_i32_1 = arith.constant 0 : i32
    return %c0_i32, %c0_i32_0 : i32, i32
  }
  func.func @transform_3(%arg0: i32) -> (i32, i32) {
    %c0_i32 = arith.constant 0 : i32
    %c0_i32_0 = arith.constant 0 : i32
    return %arg0, %c0_i32 : i32, i32
  }
  func.func @transform_4(%arg0: i32) -> (i32, i32) {
    %c0_i32 = arith.constant 0 : i32
    %c0_i32_0 = arith.constant 0 : i32
    return %arg0, %c0_i32 : i32, i32
  }
}

</mosaic_0001>

<llo_original>
// kernel: tpu_custom_call.1
$region0: #{tpu_custom_call.1}
  #allocation0 [shape = 'u32[]', space=smem, size = 0x4, offset = 0x4, fixed_abs, tag = 'smem constant byte address 0x4 - core index']
  #allocation1 [shape = 'u32[72,128]{1,0:T(1,128)}', space=vmem, size = 0x9000, scoped, tag = 'internal scratch']
  %s0 = inlined_call_operand.vmem [shape: f32[16,32], index: 0, kind: input, shape index: {}]
  %s1 = inlined_call_operand.vmem [shape: f32[32,8], index: 1, kind: input, shape index: {}]
  %s2 = inlined_call_operand.vmem [shape: f32[1,8], index: 2, kind: input, shape index: {}]
  %s3 = inlined_call_operand.vmem [shape: f32[16,8], index: 3, kind: output, shape index: {0}]
  %s4 = inlined_call_operand.vmem [shape: f32[16,4], index: 4, kind: output, shape index: {1}]
  %5 = xla_tuple %s3, %s4
  %s6 = sld [smem:[#allocation0]]
  $region53: #{tpu_custom_call.1} parent=0
    _
  %s8 = ssub.s32 1, %s6
  %s9 = scalar_select 0, %s8, %s6
  loop: start=0, step=1, limit=4
  $region2: #{tpu_custom_call.1} parent=0 // loop_pre_header
    _
  $region3: #{tpu_custom_call.1} parent=0 // loop_header
    %s11 = sphi 0, %s15
    %p12 = scmp.ge.s32.totalorder %s11, 4
    %s21 = sphi 0, %s23
    %s24 = sphi 0, %s21
    %s25 = sphi 0, %s24
    %s41 = sphi 0, %s25
    %s45 = sphi 0, %s45
    %s47 = sphi 0, %s45
    %s48 = sphi 0, %s47
    %s62 = sphi 0, %s48
    %s66 = sphi 0, %s66
    %s68 = sphi 0, %s66
    %s69 = sphi 0, %s68
    %s83 = sphi 0, %s69
    %s89 = sphi 0, %s91
    %s92 = sphi 0, %s89
    %s93 = sphi 0, %s92
    %s109 = sphi 0, %s93
    %s115 = sphi 0, %s117
    %s118 = sphi 0, %s115
    %s119 = sphi 0, %s118
    %s135 = sphi 0, %s119
  $region4: #{tpu_custom_call.1} parent=0 // loop_header_branch
    %14 = sbr.rel (%p12) target = $region8
  $region5: #{tpu_custom_call.1} parent=0 // loop_body
    %s16 = ssub.s32 %s11, 1
    %s17 = ssub.s32 %s11, 2
    %s18 = sadd.s32 %s11, 1
    %s19 = ssub.s32 %s11, %s18
    %p20 = scmp.eq.s32.totalorder %s19, 0
    %s22 = sadd.s32 %s21, 1
    %s23 = scalar_select %p20, %s21, %s22
    %p26 = pneg %p20
    %p27 = scmp.eq.s32.totalorder %s11, 1
    %p28 = por %p26, %p27
    %p29 = scmp.ne.s32.totalorder %s21, %s24
    %p30 = scmp.eq.s32.totalorder %s11, 0
    %p31 = por %p29, %p30
    %p32 = scmp.ne.s32.totalorder %s21, %s24
    %p33 = scmp.eq.s32.totalorder %s16, 1
    %p34 = por %p32, %p33
    %p35 = scmp.ne.s32.totalorder %s24, %s25
    %p36 = scmp.eq.s32.totalorder %s16, 0
    %p37 = por %p35, %p36
    %p38 = scmp.ne.s32.totalorder %s24, %s25
    %p39 = scmp.eq.s32.totalorder %s17, 1
    %p40 = por %p38, %p39
    %p42 = scmp.ne.s32.totalorder %s25, %s41
    %p43 = scmp.eq.s32.totalorder %s17, 0
    %p44 = por %p42, %p43
    %s46 = sadd.s32 %s45, 1
    %p49 = scmp.eq.s32.totalorder %s11, 1
    %p50 = scmp.ne.s32.totalorder %s45, %s47
    %p51 = scmp.eq.s32.totalorder %s11, 0
    %p52 = por %p50, %p51
    %p53 = scmp.ne.s32.totalorder %s45, %s47
    %p54 = scmp.eq.s32.totalorder %s16, 1
    %p55 = por %p53, %p54
    %p56 = scmp.ne.s32.totalorder %s47, %s48
    %p57 = scmp.eq.s32.totalorder %s16, 0
    %p58 = por %p56, %p57
    %p59 = scmp.ne.s32.totalorder %s47, %s48
    %p60 = scmp.eq.s32.totalorder %s17, 1
    %p61 = por %p59, %p60
    %p63 = scmp.ne.s32.totalorder %s48, %s62
    %p64 = scmp.eq.s32.totalorder %s17, 0
    %p65 = por %p63, %p64
    %s67 = sadd.s32 %s66, 1
    %p70 = scmp.eq.s32.totalorder %s11, 1
    %p71 = scmp.ne.s32.totalorder %s66, %s68
    %p72 = scmp.eq.s32.totalorder %s11, 0
    %p73 = por %p71, %p72
    %p74 = scmp.ne.s32.totalorder %s66, %s68
    %p75 = scmp.eq.s32.totalorder %s16, 1
    %p76 = por %p74, %p75
    %p77 = scmp.ne.s32.totalorder %s68, %s69
    %p78 = scmp.eq.s32.totalorder %s16, 0
    %p79 = por %p77, %p78
    %p80 = scmp.ne.s32.totalorder %s68, %s69
    %p81 = scmp.eq.s32.totalorder %s17, 1
    %p82 = por %p80, %p81
    %p84 = scmp.ne.s32.totalorder %s69, %s83
    %p85 = scmp.eq.s32.totalorder %s17, 0
    %p86 = por %p84, %p85
    %s87 = ssub.s32 %s11, %s18
    %p88 = scmp.eq.s32.totalorder %s87, 0
    %s90 = sadd.s32 %s89, 1
    %s91 = scalar_select %p88, %s89, %s90
    %p94 = pneg %p88
    %p95 = scmp.eq.s32.totalorder %s11, 1
    %p96 = por %p94, %p95
    %p97 = scmp.ne.s32.totalorder %s89, %s92
    %p98 = scmp.eq.s32.totalorder %s11, 0
    %p99 = por %p97, %p98
    %p100 = scmp.ne.s32.totalorder %s89, %s92
    %p101 = scmp.eq.s32.totalorder %s16, 1
    %p102 = por %p100, %p101
    %p103 = scmp.ne.s32.totalorder %s92, %s93
    %p104 = scmp.eq.s32.totalorder %s16, 0
    %p105 = por %p103, %p104
    %p106 = scmp.ne.s32.totalorder %s92, %s93
    %p107 = scmp.eq.s32.totalorder %s17, 1
    %p108 = por %p106, %p107
    %p110 = scmp.ne.s32.totalorder %s93, %s109
    %p111 = scmp.eq.s32.totalorder %s17, 0
    %p112 = por %p110, %p111
    %s113 = ssub.s32 %s11, %s18
    %p114 = scmp.eq.s32.totalorder %s113, 0
    %s116 = sadd.s32 %s115, 1
    %s117 = scalar_select %p114, %s115, %s116
    %p120 = pneg %p114
    %p121 = scmp.eq.s32.totalorder %s11, 1
    %p122 = por %p120, %p121
    %p123 = scmp.ne.s32.totalorder %s115, %s118
    %p124 = scmp.eq.s32.totalorder %s11, 0
    %p125 = por %p123, %p124
    %p126 = scmp.ne.s32.totalorder %s115, %s118
    %p127 = scmp.eq.s32.totalorder %s16, 1
    %p128 = por %p126, %p127
    %p129 = scmp.ne.s32.totalorder %s118, %s119
    %p130 = scmp.eq.s32.totalorder %s16, 0
    %p131 = por %p129, %p130
    %p132 = scmp.ne.s32.totalorder %s118, %s119
    %p133 = scmp.eq.s32.totalorder %s17, 1
    %p134 = por %p132, %p133
    %p136 = scmp.ne.s32.totalorder %s119, %s135
    %p137 = scmp.eq.s32.totalorder %s17, 0
    %p138 = por %p136, %p137
    %p139 = scmp.le.s32.totalorder 1, %s11
    %p140 = scmp.lt.s32.totalorder %s11, 3
    %p141 = pnand %p139, %p140
    %p142 = pneg %p141
    // Predicated region
    $region9: #{tpu_custom_call.1} parent=5 // pred_check
      _
    $region10: #{tpu_custom_call.1} parent=5 // pred_check_branch
      %144 = sbr.rel (%p141) target = $region12
    $region11: #{tpu_custom_call.1} parent=5 // pred_region
      %s145 = ssub.s32 %s11, 1
      // Predicated region
      $region13: #{tpu_custom_call.1} parent=11 // pred_check
        %p146 = pneg %p58
      $region14: #{tpu_custom_call.1} parent=11 // pred_check_branch
        %148 = sbr.rel (%p146) target = $region16
      $region15: #{tpu_custom_call.1} parent=11 // pred_region
        _
      $region16: #{tpu_custom_call.1} parent=11 // pred_fallthru
        _
      // Predicated region
      $region17: #{tpu_custom_call.1} parent=11 // pred_check
        %p149 = pneg %p79
      $region18: #{tpu_custom_call.1} parent=11 // pred_check_branch
        %151 = sbr.rel (%p149) target = $region20
      $region19: #{tpu_custom_call.1} parent=11 // pred_region
        _
      $region20: #{tpu_custom_call.1} parent=11 // pred_fallthru
        _
    $region12: #{tpu_custom_call.1} parent=5 // pred_fallthru
      _
    %p152 = scmp.lt.s32.totalorder %s11, 2
    // Predicated region
    $region21: #{tpu_custom_call.1} parent=5 // pred_check
      %p153 = pneg %p152
    $region22: #{tpu_custom_call.1} parent=5 // pred_check_branch
      %155 = sbr.rel (%p153) target = $region24
    $region23: #{tpu_custom_call.1} parent=5 // pred_region
      // Predicated region
      $region25: #{tpu_custom_call.1} parent=23 // pred_check
        %p156 = pneg %p31
      $region26: #{tpu_custom_call.1} parent=23 // pred_check_branch
        %158 = sbr.rel (%p156) target = $region28
      $region27: #{tpu_custom_call.1} parent=23 // pred_region
        %p159 = scmp.lt.s32.totalorder %s11, 1
        %s160 = scalar_select %p159, %s11, 1
        %s161 = smul.addr %s160, 8
        %s162 = scalar_lea.vmem %s0, %s161
      $region28: #{tpu_custom_call.1} parent=23 // pred_fallthru
        _
    $region24: #{tpu_custom_call.1} parent=5 // pred_fallthru
      _
    %p163 = scmp.le.s32.totalorder 1, %s11
    %p164 = scmp.lt.s32.totalorder %s11, 3
    %p165 = pnand %p163, %p164
    %p166 = pneg %p165
    // Predicated region
    $region29: #{tpu_custom_call.1} parent=5 // pred_check
      _
    $region30: #{tpu_custom_call.1} parent=5 // pred_check_branch
      %168 = sbr.rel (%p165) target = $region32
    $region31: #{tpu_custom_call.1} parent=5 // pred_region
      %s169 = ssub.s32 %s11, 1
      %p170 = scmp.lt.s32.totalorder %s16, 1
      %s171 = scalar_select %p170, %s16, 1
      %s172 = smul.addr %s171, 8
      %s173 = scalar_lea.vmem %s0, %s172
      %p174 = pneg %p37
      %p175 = pneg %p34
      %p176 = pneg %p58
      %p177 = pneg %p55
      %p178 = pneg %p79
      %p179 = pneg %p76
      %p180 = pneg %p105
      %p181 = pneg %p102
      %p182 = scmp.lt.s32.totalorder %s16, 1
      %s183 = scalar_select %p182, %s16, 1
      %s184 = smul.addr %s183, 8
      %s185 = scalar_lea.vmem %s3, %s184
      %p186 = pneg %p131
      %p187 = pneg %p128
      %p188 = scmp.lt.s32.totalorder %s16, 1
      %s189 = scalar_select %p188, %s16, 1
      %s190 = smul.addr %s189, 8
      %s191 = scalar_lea.vmem %s4, %s190
      %p192 = scmp.lt.s32.totalorder %s16, 1
      %s193 = scalar_select %p192, %s16, 1
      %s194 = smul.addr %s193, 8
      %s195 = scalar_lea.vmem %s0, %s194
      %p196 = scmp.lt.s32.totalorder %s16, 1
      %s197 = scalar_select %p196, %s16, 1
      %s198 = smul.addr %s197, 8
      %s199 = scalar_lea.vmem %s3, %s198
      %p200 = scmp.lt.s32.totalorder %s16, 1
      %s201 = scalar_select %p200, %s16, 1
      %s202 = smul.addr %s201, 8
      %s203 = scalar_lea.vmem %s4, %s202
      %v204 = vld [vmem:[%s195] sm:$0xff]
      %v205 = vld [vmem:[%s1] sm:$0xff]
      %v206 = vld [vmem:[%s1 + $0x8] sm:$0xff]
      %v207 = vld [vmem:[%s1 + $0x10] sm:$0xff]
      %v208 = vld [vmem:[%s1 + $0x18] sm:$0xff]
      %v209 = vld [vmem:[%s2] sm:$0x1]
      %v211 = vperm.slane %v209, 0
      %vm213 = vcmask 261120
      %v215 = vsel %vm213, %v204, 0
      %217 = vmatpush.msra.mxu0 0.0
      %218 = vmatpush.msra.mxu0 0.0
      %219 = vmatpush.msra.mxu0 0.0
      %220 = vmatpush.msra.mxu0 0.0
      %221 = vmatpush.msra.mxu0 0.0
      %222 = vmatpush.msra.mxu0 0.0
      %223 = vmatpush.msra.mxu0 0.0
      %224 = vmatpush.msra.mxu0 0.0
      %225 = vmatpush.msra.mxu0 0.0
      %226 = vmatpush.msra.mxu0 0.0
      %227 = vmatpush.msra.mxu0 0.0
      %228 = vmatpush.msra.mxu0 0.0
      %229 = vmatpush.msra.mxu0 %v208
      %230 = vmatpush.msra.mxu0 %v207
      %231 = vmatpush.msra.mxu0 %v206
      %232 = vmatpush.msra.mxu0 %v205
      %233 = vmatmul.f32.gmra.mxu0 %v215
      %v234 = vpop.f32.mrf.mxu0
      %v235 = vadd.f32 %v211, %v234
      %236 = vdwg.mxu0
      %vm237 = vcmask 64512
      %v238 = vsel %vm237, %v235, -inf
      %239 = vmax.xlane.f32.xlu0 %v238
      %v240 = vpop.xlane.xlu0 %239
      %v241 = vsub.f32 %v235, %v240
      %v242 = vmul.f32 %v241, 1.442695
      %v243 = vpow.pop %v242
      %v244 = vsel %vm237, %v243, 0.0
      %245 = vadd.xlane.f32.xlu0 %v244
      %v246 = vpop.xlane.xlu0 %245
      %v247 = vrcp.pop %v246
      %v248 = vmul.f32 %v246, %v247
      %v249 = vsub.f32 1.0, %v248
      %v250 = vmul.f32 %v247, %v249
      %v251 = vadd.f32 %v247, %v250
      %vm252 = vweird.f32 %v246
      %vm253 = vweird.f32 %v247
      %vm254 = vmor %vm252, %vm253
      %v255 = vsel %vm254, %v247, %v251
      %v256 = vand.u32 2147483647, %v246
      %vm257 = vcmp.eq.f32.partialorder %v256, 8.507059e+37
      %v258 = vand.u32 %v246, 2147483648
      %v259 = vor.u32 1.1754944e-38, %v258
      %v260 = vsel %vm257, %v259, %v255
      %v261 = vmul.f32 %v243, %v260
      %262 = vst.msk [vmem:[%s199] sm:$0xff] %vm237, %v261
      %v263 = vlaneseq
      %v264 = vand.u32 %v263, 127
      %vm265 = vcmp.eq.f32.partialorder %v235, %v240
      %v266 = vsel %vm265, %v264, 8
      %v267 = vsel %vm237, %v266, 2147483647
      %v268 = vand.u32 %v267, 65535
      %v269 = vshra.s32 %v267, 16
      %v270 = vcvt.s32.f32 %v268
      %v271 = vcvt.s32.f32 %v269
      %272 = vmin.xlane.f32.xlu0 %v271
      %v273 = vpop.xlane.xlu0 %272
      %vm274 = vcmp.eq.f32.partialorder %v271, %v273
      %v275 = vsel %vm274, %v270, inf
      %276 = vmin.xlane.f32.xlu0 %v275
      %v277 = vpop.xlane.xlu0 %276
      %v278 = vcvt.f32.s32 %v277
      %v279 = vcvt.f32.s32 %v273
      %v280 = vshll.u32 %v279, 16
      %v281 = vadd.s32 %v280, %v278
      %v282 = vcvt.s32.f32 %v281
      %vm283 = vcmp.eq.s32.totalorder %v264, %v281
      %v284 = vsel %vm283, -1.0, %v243
      %v285 = vsel %vm237, %v284, -inf
      %286 = vmax.xlane.f32.xlu0 %v285
      %v287 = vpop.xlane.xlu0 %286
      %vm288 = vcmp.eq.f32.partialorder %v284, %v287
      %v289 = vsel %vm288, %v264, 8
      %v290 = vsel %vm237, %v289, 2147483647
      %v291 = vand.u32 %v290, 65535
      %v292 = vshra.s32 %v290, 16
      %v293 = vcvt.s32.f32 %v291
      %v294 = vcvt.s32.f32 %v292
      %295 = vmin.xlane.f32.xlu0 %v294
      %v296 = vpop.xlane.xlu0 %295
      %vm297 = vcmp.eq.f32.partialorder %v294, %v296
      %v298 = vsel %vm297, %v293, inf
      %299 = vmin.xlane.f32.xlu0 %v298
      %v300 = vpop.xlane.xlu0 %299
      %v301 = vcvt.f32.s32 %v300
      %v302 = vcvt.f32.s32 %v296
      %v303 = vshll.u32 %v302, 16
      %v304 = vadd.s32 %v303, %v301
      %v305 = vmul.f32 %v287, %v260
      %v306 = vcvt.s32.f32 %v304
      %vm307 = vcmask 7168
      %v308 = vsel %vm307, %v260, %v305
      %vm309 = vcmask 15360
      %v310 = vsel %vm309, %v308, %v282
      %vm311 = vcmask 23552
      %v312 = vsel %vm311, %v310, %v306
      %vm313 = vcmask 31744
      %314 = vst.msk [vmem:[%s203] sm:$0xff] %vm313, %v312
      %p315 = scmp.lt.s32.totalorder %s16, 1
      %s316 = scalar_select %p315, %s16, 1
      %s317 = smul.addr %s316, 8
      %s318 = scalar_lea.vmem %s3, %s317
      %p319 = scmp.lt.s32.totalorder %s16, 1
      %s320 = scalar_select %p319, %s16, 1
      %s321 = smul.addr %s320, 8
      %s322 = scalar_lea.vmem %s4, %s321
      // Predicated region
      $region33: #{tpu_custom_call.1} parent=31 // pred_check
        %p323 = pneg %p102
      $region34: #{tpu_custom_call.1} parent=31 // pred_check_branch
        %325 = sbr.rel (%p323) target = $region36
      $region35: #{tpu_custom_call.1} parent=31 // pred_region
        _
      $region36: #{tpu_custom_call.1} parent=31 // pred_fallthru
        _
      // Predicated region
      $region37: #{tpu_custom_call.1} parent=31 // pred_check
        %p326 = pneg %p128
      $region38: #{tpu_custom_call.1} parent=31 // pred_check_branch
        %328 = sbr.rel (%p326) target = $region40
      $region39: #{tpu_custom_call.1} parent=31 // pred_region
        _
      $region40: #{tpu_custom_call.1} parent=31 // pred_fallthru
        _
    $region32: #{tpu_custom_call.1} parent=5 // pred_fallthru
      _
    %p329 = scmp.le.s32.totalorder 2, %s11
    // Predicated region
    $region41: #{tpu_custom_call.1} parent=5 // pred_check
      %p330 = pneg %p329
    $region42: #{tpu_custom_call.1} parent=5 // pred_check_branch
      %332 = sbr.rel (%p330) target = $region44
    $region43: #{tpu_custom_call.1} parent=5 // pred_region
      %s333 = ssub.s32 %s11, 2
      // Predicated region
      $region45: #{tpu_custom_call.1} parent=43 // pred_check
        %p334 = pneg %p108
      $region46: #{tpu_custom_call.1} parent=43 // pred_check_branch
        %336 = sbr.rel (%p334) target = $region48
      $region47: #{tpu_custom_call.1} parent=43 // pred_region
        %p337 = scmp.lt.s32.totalorder %s17, 1
        %s338 = scalar_select %p337, %s17, 1
        %s339 = smul.addr %s338, 8
        %s340 = scalar_lea.vmem %s3, %s339
      $region48: #{tpu_custom_call.1} parent=43 // pred_fallthru
        _
      // Predicated region
      $region49: #{tpu_custom_call.1} parent=43 // pred_check
        %p341 = pneg %p134
      $region50: #{tpu_custom_call.1} parent=43 // pred_check_branch
        %343 = sbr.rel (%p341) target = $region52
      $region51: #{tpu_custom_call.1} parent=43 // pred_region
        %p344 = scmp.lt.s32.totalorder %s17, 1
        %s345 = scalar_select %p344, %s17, 1
        %s346 = smul.addr %s345, 8
        %s347 = scalar_lea.vmem %s4, %s346
      $region52: #{tpu_custom_call.1} parent=43 // pred_fallthru
        _
    $region44: #{tpu_custom_call.1} parent=5 // pred_fallthru
      _
  $region6: #{tpu_custom_call.1} parent=0 // loop_footer
    %s15 = sadd.s32 1, %s11
  $region7: #{tpu_custom_call.1} parent=0 // loop_footer_branch
    %10 = sbr.rel target = $region3
  $region8: #{tpu_custom_call.1} parent=0 // loop_exit
    _

</llo_original>
